<compile_context>
chip_gen: v6e
topology: v6e:2x2x1
jax: 0.10.0
libtpu: 0.0.40
codegen_flags: <defaults>
</compile_context>

<pallas_src>
import functools
import math

import jax
import jax.numpy as jnp
from jax.experimental import pallas as pl
from jax.experimental.pallas import tpu as pltpu


def _round_up(x, m):
    return (x + m - 1) // m * m


def _default_bf16_epilogue():
    # bf16 VPU epilogue only on bf16-native VALU chips (v6e / v7x); f32 on v5e.
    try:
        kind = jax.devices()[0].device_kind.lower()
    except Exception:
        return False
    return ("v6" in kind) or ("v7" in kind)


def _pick_tm(M):
    """Row-block size: large tiles to amortize the ~0.35us per-grid-step
    overhead, but keep >=2 grid steps for moderately large M so both of
    v7x's TensorCores get work (harmless on single-TC v5e/v6e)."""
    tm = min(_round_up(M, 8), 512)
    if M > 128 and pl.cdiv(M, tm) < 2:
        tm = _round_up(pl.cdiv(M, 2), 8)
    return max(tm, 8)


# ----------------------------------------------------------------------------
# Fused kernel: Linear -> LayerNorm -> LeakyReLU(0.2) -> Linear -> LayerNorm
# (LN mean-centering is pre-folded into the weights; only E[h^2] is needed.)
# ----------------------------------------------------------------------------
def _action_encoder_kernel(x_ref, w1_ref, p1_ref, w2_ref, p2_ref, o_ref, *,
                           eps, bf16_epilogue):
    # p1 rows: 0 = b1 (centered), 1 = gamma1, 2 = beta1   (shape (8, H))
    # p2 rows: 0 = b2 (centered), 1 = gamma2, 2 = beta2   (shape (8, O))
    x = x_ref[...].astype(jnp.float32)                      # (TM, A)
    a_dim = x_ref.shape[1]

    # ---- Linear(action_dim -> hidden): VPU broadcast-FMA (K is tiny) -------
    h = x[:, 0:1] * w1_ref[0:1, :]
    for a in range(1, a_dim):                               # A is static; unrolled
        h = h + x[:, a:a + 1] * w1_ref[a:a + 1, :]
    h = h + p1_ref[0:1, :]                                  # h is zero-mean per row

    # ---- LayerNorm(hidden): variance only (mean folded into weights) -------
    var = jnp.mean(h * h, axis=-1, keepdims=True)
    h = h * jax.lax.rsqrt(var + eps)

    # ---- LN1 affine + LeakyReLU(0.2) ----------------------------------------
    if bf16_epilogue:
        h = h.astype(jnp.bfloat16)
        h = h * p1_ref[1:2, :].astype(jnp.bfloat16) \
              + p1_ref[2:3, :].astype(jnp.bfloat16)
        h = jnp.maximum(h, 0.2 * h)                         # bf16 VPU
    else:
        h = h * p1_ref[1:2, :] + p1_ref[2:3, :]
        h = jnp.maximum(h, 0.2 * h)                         # f32 VPU (v5e safe)
        h = h.astype(jnp.bfloat16)

    # ---- Linear(hidden -> output): bf16 MXU operands, f32 accumulation -----
    y = jnp.dot(h, w2_ref[...], preferred_element_type=jnp.float32)
    y = y + p2_ref[0:1, :]                                  # y is ~zero-mean per row

    # ---- LayerNorm(output): variance only -----------------------------------
    var2 = jnp.mean(y * y, axis=-1, keepdims=True)
    y = y * jax.lax.rsqrt(var2 + eps)
    o_ref[...] = (y * p2_ref[1:2, :] + p2_ref[2:3, :]).astype(o_ref.dtype)


# ----------------------------------------------------------------------------
# One-time parameter preparation (hoisted out of the forward call)
# ----------------------------------------------------------------------------
def prepare_params(params):
    """Fold LayerNorm mean-centering into the linears, cast the MXU weight to
    bf16, and pack the per-feature vectors into single (8, N) VMEM tiles."""
    w1 = params['w1'].astype(jnp.float32)
    b1 = params['b1'].astype(jnp.float32)
    w2 = params['w2'].astype(jnp.float32)
    b2 = params['b2'].astype(jnp.float32)
    H = w1.shape[1]
    O = w2.shape[1]

    # LayerNorm centers over the feature axis -> fold exactly into weights.
    w1c = w1 - jnp.mean(w1, axis=1, keepdims=True)
    b1c = b1 - jnp.mean(b1)
    w2c = w2 - jnp.mean(w2, axis=1, keepdims=True)
    b2c = b2 - jnp.mean(b2)

    p1 = jnp.zeros((8, H), jnp.float32)
    p1 = p1.at[0].set(b1c) \
           .at[1].set(params['g1'].astype(jnp.float32)) \
           .at[2].set(params['be1'].astype(jnp.float32))
    p2 = jnp.zeros((8, O), jnp.float32)
    p2 = p2.at[0].set(b2c) \
           .at[1].set(params['g2'].astype(jnp.float32)) \
           .at[2].set(params['be2'].astype(jnp.float32))

    return dict(w1=w1c, p1=p1, w2=w2c.astype(jnp.bfloat16), p2=p2)


# ----------------------------------------------------------------------------
# Forward wrapper
# ----------------------------------------------------------------------------
def action_encoder_forward(prepared, actions, *, eps=1e-5, bf16_epilogue=None):
    """actions: (..., action_dim) -> (..., output_dim).  Eval semantics."""
    *lead, A = actions.shape
    M = 1
    for d in lead:
        M *= d
    x = actions.reshape(M, A).astype(jnp.float32)

    H = prepared['w1'].shape[1]
    O = prepared['w2'].shape[1]
    if bf16_epilogue is None:
        bf16_epilogue = _default_bf16_epilogue()

    tm = _pick_tm(M)
    full = lambda i: (0, 0)
    out = pl.pallas_call(
        functools.partial(_action_encoder_kernel, eps=eps,
                          bf16_epilogue=bf16_epilogue),
        out_shape=jax.ShapeDtypeStruct((M, O), jnp.float32),
        grid=(pl.cdiv(M, tm),),            # ragged last block handled by Pallas
        in_specs=[
            pl.BlockSpec((tm, A), lambda i: (i, 0)),
            pl.BlockSpec((A, H), full),
            pl.BlockSpec((8, H), full),
            pl.BlockSpec((H, O), full),
            pl.BlockSpec((8, O), full),
        ],
        out_specs=pl.BlockSpec((tm, O), lambda i: (i, 0)),
        compiler_params=pltpu.CompilerParams(
            dimension_semantics=("parallel",)),
    )(x, prepared['w1'], prepared['p1'], prepared['w2'], prepared['p2'])

    return out.reshape(*lead, O)


# ----------------------------------------------------------------------------
# Pure-JAX reference (f32 everywhere) for a correctness check
# ----------------------------------------------------------------------------
def _ln_ref(x, g, b, eps):
    mu = jnp.mean(x, axis=-1, keepdims=True)
    var = jnp.mean((x - mu) ** 2, axis=-1, keepdims=True)
    return (x - mu) * jax.lax.rsqrt(var + eps) * g + b


def reference_forward(params, actions, *, eps=1e-5):
    x = actions.astype(jnp.float32)
    h = x @ params['w1'] + params['b1']
    h = _ln_ref(h, params['g1'], params['be1'], eps)
    h = jnp.where(h > 0, h, 0.2 * h)
    y = h @ params['w2'] + params['b2']
    return _ln_ref(y, params['g2'], params['be2'], eps)


# ----------------------------------------------------------------------------
# Deterministic parameter init (PyTorch-style Linear init; perturbed LN affine)
# ----------------------------------------------------------------------------
def init_params(key, action_dim=2, hidden_dim=128, output_dim=128):
    ks = jax.random.split(key, 8)

    def linear(kw, kb, din, dout):
        bound = 1.0 / math.sqrt(din)
        w = jax.random.uniform(kw, (din, dout), jnp.float32, -bound, bound)
        b = jax.random.uniform(kb, (dout,), jnp.float32, -bound, bound)
        return w, b

    w1, b1 = linear(ks[0], ks[1], action_dim, hidden_dim)
    w2, b2 = linear(ks[2], ks[3], hidden_dim, output_dim)
    g1 = 1.0 + 0.05 * jax.random.normal(ks[4], (hidden_dim,), jnp.float32)
    be1 = 0.05 * jax.random.normal(ks[5], (hidden_dim,), jnp.float32)
    g2 = 1.0 + 0.05 * jax.random.normal(ks[6], (output_dim,), jnp.float32)
    be2 = 0.05 * jax.random.normal(ks[7], (output_dim,), jnp.float32)
    return dict(w1=w1, b1=b1, g1=g1, be1=be1, w2=w2, b2=b2, g2=g2, be2=be2)


# ----------------------------------------------------------------------------
if __name__ == "__main__":
    key = jax.random.PRNGKey(0)
    A, HIDDEN, OUT = 2, 128, 128

    params = init_params(jax.random.fold_in(key, 2), A, HIDDEN, OUT)
    prepared = prepare_params(params)                      # one-time prep

    fwd = jax.jit(action_encoder_forward)

    # Primary small test: batch=2, seq=8, action_dim=2.
    actions = jax.random.normal(jax.random.fold_in(key, 1), (2, 8, A), jnp.float32)
    out = fwd(prepared, actions)
    jax.block_until_ready(out)
    assert out.shape == (2, 8, OUT)
    assert bool(jnp.all(jnp.isfinite(out)))
    ref = reference_forward(params, actions)
    err = float(jnp.max(jnp.abs(out - ref)))
    assert err < 5e-2, f"max abs error {err}"

    # Ragged-M test: exercises the cdiv grid / masked last block (no pad, no slice).
    actions2 = jax.random.normal(jax.random.fold_in(key, 3), (1, 300, A), jnp.float32)
    out2 = fwd(prepared, actions2)
    jax.block_until_ready(out2)
    assert out2.shape == (1, 300, OUT)
    assert bool(jnp.all(jnp.isfinite(out2)))
    ref2 = reference_forward(params, actions2)
    err2 = float(jnp.max(jnp.abs(out2 - ref2)))
    assert err2 < 5e-2, f"max abs error {err2}"

    print("KERNEL_OK")
</pallas_src>

<mosaic_0001>
module attributes {stable_mosaic.version = 11 : i64} {
  func.func @_action_encoder_kernel(%arg0: i32, %arg1: memref<16x2xf32, #tpu.memory_space<vmem>>, %arg2: memref<2x128xf32, #tpu.memory_space<vmem>>, %arg3: memref<8x128xf32, #tpu.memory_space<vmem>>, %arg4: memref<128x128xbf16, #tpu.memory_space<vmem>>, %arg5: memref<8x128xf32, #tpu.memory_space<vmem>>, %arg6: memref<16x128xf32, #tpu.memory_space<vmem>>) attributes {dimension_semantics = [#tpu.dimension_semantics<parallel>], iteration_bounds = array<i64: 1>, scalar_prefetch = 0 : i64, scratch_operands = 0 : i64, tpu.core_type = #tpu.core_type<tc>, window_params = [{transform_indices = @transform_0, window_bounds = array<i64: 16, 2>}, {pipeline_mode = #tpu.pipeline_mode<synchronous>, transform_indices = @transform_1, window_bounds = array<i64: 2, 128>}, {pipeline_mode = #tpu.pipeline_mode<synchronous>, transform_indices = @transform_2, window_bounds = array<i64: 8, 128>}, {pipeline_mode = #tpu.pipeline_mode<synchronous>, transform_indices = @transform_3, window_bounds = array<i64: 128, 128>}, {pipeline_mode = #tpu.pipeline_mode<synchronous>, transform_indices = @transform_4, window_bounds = array<i64: 8, 128>}, {transform_indices = @transform_5, window_bounds = array<i64: 16, 128>}]} {
    %c0 = arith.constant 0 : index
    %c0_0 = arith.constant 0 : index
    %0 = vector.load %arg1[%c0, %c0_0] : memref<16x2xf32, #tpu.memory_space<vmem>>, vector<16x2xf32>
    %1 = vector.extract_strided_slice %0 {offsets = [0, 0], sizes = [16, 1], strides = [1, 1]} : vector<16x2xf32> to vector<16x1xf32>
    %c0_1 = arith.constant 0 : index
    %c0_2 = arith.constant 0 : index
    %2 = vector.load %arg2[%c0_1, %c0_2] : memref<2x128xf32, #tpu.memory_space<vmem>>, vector<1x128xf32>
    %3 = vector.broadcast %1 : vector<16x1xf32> to vector<16x128xf32>
    %4 = vector.broadcast %2 : vector<1x128xf32> to vector<16x128xf32>
    %5 = arith.mulf %3, %4 : vector<16x128xf32>
    %6 = vector.extract_strided_slice %0 {offsets = [0, 1], sizes = [16, 1], strides = [1, 1]} : vector<16x2xf32> to vector<16x1xf32>
    %c1 = arith.constant 1 : index
    %c0_3 = arith.constant 0 : index
    %7 = vector.load %arg2[%c1, %c0_3] : memref<2x128xf32, #tpu.memory_space<vmem>>, vector<1x128xf32>
    %8 = vector.broadcast %6 : vector<16x1xf32> to vector<16x128xf32>
    %9 = vector.broadcast %7 : vector<1x128xf32> to vector<16x128xf32>
    %10 = arith.mulf %8, %9 : vector<16x128xf32>
    %11 = arith.addf %5, %10 : vector<16x128xf32>
    %c0_4 = arith.constant 0 : index
    %c0_5 = arith.constant 0 : index
    %12 = vector.load %arg3[%c0_4, %c0_5] : memref<8x128xf32, #tpu.memory_space<vmem>>, vector<1x128xf32>
    %13 = vector.broadcast %12 : vector<1x128xf32> to vector<16x128xf32>
    %14 = arith.addf %11, %13 : vector<16x128xf32>
    %15 = arith.mulf %14, %14 : vector<16x128xf32>
    %cst = arith.constant dense<0.000000e+00> : vector<16xf32>
    %16 = vector.multi_reduction <add>, %15, %cst [1] : vector<16x128xf32> to vector<16xf32>
    %17 = vector.shape_cast %16 : vector<16xf32> to vector<16x1xf32>
    %cst_6 = arith.constant 1.280000e+02 : f32
    %18 = vector.broadcast %cst_6 : f32 to vector<16x1xf32>
    %19 = arith.divf %17, %18 : vector<16x1xf32>
    %cst_7 = arith.constant 9.99999974E-6 : f32
    %20 = vector.broadcast %cst_7 : f32 to vector<16x1xf32>
    %21 = arith.addf %19, %20 : vector<16x1xf32>
    %22 = math.rsqrt %21 : vector<16x1xf32>
    %23 = vector.broadcast %22 : vector<16x1xf32> to vector<16x128xf32>
    %24 = arith.mulf %14, %23 : vector<16x128xf32>
    %c1_8 = arith.constant 1 : index
    %c0_9 = arith.constant 0 : index
    %25 = vector.load %arg3[%c1_8, %c0_9] : memref<8x128xf32, #tpu.memory_space<vmem>>, vector<1x128xf32>
    %26 = vector.broadcast %25 : vector<1x128xf32> to vector<16x128xf32>
    %27 = arith.mulf %24, %26 : vector<16x128xf32>
    %c2 = arith.constant 2 : index
    %c0_10 = arith.constant 0 : index
    %28 = vector.load %arg3[%c2, %c0_10] : memref<8x128xf32, #tpu.memory_space<vmem>>, vector<1x128xf32>
    %29 = vector.broadcast %28 : vector<1x128xf32> to vector<16x128xf32>
    %30 = arith.addf %27, %29 : vector<16x128xf32>
    %cst_11 = arith.constant 2.000000e-01 : f32
    %31 = vector.broadcast %cst_11 : f32 to vector<16x128xf32>
    %32 = arith.mulf %31, %30 : vector<16x128xf32>
    %33 = arith.maximumf %30, %32 : vector<16x128xf32>
    %34 = arith.truncf %33 : vector<16x128xf32> to vector<16x128xbf16>
    %c0_12 = arith.constant 0 : index
    %c0_13 = arith.constant 0 : index
    %35 = vector.load %arg4[%c0_12, %c0_13] : memref<128x128xbf16, #tpu.memory_space<vmem>>, vector<128x128xbf16>
    %cst_14 = arith.constant dense<0.000000e+00> : vector<16x128xf32>
    %36 = tpu.matmul %34, %35, %cst_14 {dimension_numbers = #tpu.dot_dimension_numbers<[1], [0], [0], [1], [0, 0, 1, 1], [], []>} : vector<16x128xbf16>, vector<128x128xbf16>, vector<16x128xf32> -> vector<16x128xf32>
    %c0_15 = arith.constant 0 : index
    %c0_16 = arith.constant 0 : index
    %37 = vector.load %arg5[%c0_15, %c0_16] : memref<8x128xf32, #tpu.memory_space<vmem>>, vector<1x128xf32>
    %38 = vector.broadcast %37 : vector<1x128xf32> to vector<16x128xf32>
    %39 = arith.addf %36, %38 : vector<16x128xf32>
    %40 = arith.mulf %39, %39 : vector<16x128xf32>
    %cst_17 = arith.constant dense<0.000000e+00> : vector<16xf32>
    %41 = vector.multi_reduction <add>, %40, %cst_17 [1] : vector<16x128xf32> to vector<16xf32>
    %42 = vector.shape_cast %41 : vector<16xf32> to vector<16x1xf32>
    %cst_18 = arith.constant 1.280000e+02 : f32
    %43 = vector.broadcast %cst_18 : f32 to vector<16x1xf32>
    %44 = arith.divf %42, %43 : vector<16x1xf32>
    %cst_19 = arith.constant 9.99999974E-6 : f32
    %45 = vector.broadcast %cst_19 : f32 to vector<16x1xf32>
    %46 = arith.addf %44, %45 : vector<16x1xf32>
    %47 = math.rsqrt %46 : vector<16x1xf32>
    %48 = vector.broadcast %47 : vector<16x1xf32> to vector<16x128xf32>
    %49 = arith.mulf %39, %48 : vector<16x128xf32>
    %c1_20 = arith.constant 1 : index
    %c0_21 = arith.constant 0 : index
    %50 = vector.load %arg5[%c1_20, %c0_21] : memref<8x128xf32, #tpu.memory_space<vmem>>, vector<1x128xf32>
    %51 = vector.broadcast %50 : vector<1x128xf32> to vector<16x128xf32>
    %52 = arith.mulf %49, %51 : vector<16x128xf32>
    %c2_22 = arith.constant 2 : index
    %c0_23 = arith.constant 0 : index
    %53 = vector.load %arg5[%c2_22, %c0_23] : memref<8x128xf32, #tpu.memory_space<vmem>>, vector<1x128xf32>
    %54 = vector.broadcast %53 : vector<1x128xf32> to vector<16x128xf32>
    %55 = arith.addf %52, %54 : vector<16x128xf32>
    %c0_24 = arith.constant 0 : index
    %c0_25 = arith.constant 0 : index
    %56 = vector.load %arg6[%c0_24, %c0_25] : memref<16x128xf32, #tpu.memory_space<vmem>>, vector<16x128xf32>
    tpu.vector_store %arg6[%c0_24, %c0_25], %55 {strides = array<i32>} : memref<16x128xf32, #tpu.memory_space<vmem>>, vector<16x128xf32>,
    return
  }
  func.func @transform_0(%arg0: i32) -> (i32, i32) {
    %c0_i32 = arith.constant 0 : i32
    %c0_i32_0 = arith.constant 0 : i32
    return %arg0, %c0_i32 : i32, i32
  }
  func.func @transform_1(%arg0: i32) -> (i32, i32) {
    %c0_i32 = arith.constant 0 : i32
    %c0_i32_0 = arith.constant 0 : i32
    %c0_i32_1 = arith.constant 0 : i32
    return %c0_i32, %c0_i32_0 : i32, i32
  }
  func.func @transform_2(%arg0: i32) -> (i32, i32) {
    %c0_i32 = arith.constant 0 : i32
    %c0_i32_0 = arith.constant 0 : i32
    %c0_i32_1 = arith.constant 0 : i32
    return %c0_i32, %c0_i32_0 : i32, i32
  }
  func.func @transform_3(%arg0: i32) -> (i32, i32) {
    %c0_i32 = arith.constant 0 : i32
    %c0_i32_0 = arith.constant 0 : i32
    %c0_i32_1 = arith.constant 0 : i32
    return %c0_i32, %c0_i32_0 : i32, i32
  }
  func.func @transform_4(%arg0: i32) -> (i32, i32) {
    %c0_i32 = arith.constant 0 : i32
    %c0_i32_0 = arith.constant 0 : i32
    %c0_i32_1 = arith.constant 0 : i32
    return %c0_i32, %c0_i32_0 : i32, i32
  }
  func.func @transform_5(%arg0: i32) -> (i32, i32) {
    %c0_i32 = arith.constant 0 : i32
    %c0_i32_0 = arith.constant 0 : i32
    return %arg0, %c0_i32 : i32, i32
  }
}

</mosaic_0001>

<llo_original>
// kernel: action_encoder_forward.1
$region0: #{action_encoder_forward.1}
  #allocation0 [shape = 'u32[]', space=smem, size = 0x4, offset = 0x4, fixed_abs, tag = 'smem constant byte address 0x4 - core index']
  #allocation1 [shape = 'u32[144,128]{1,0:T(1,128)}', space=vmem, size = 0x12000, scoped, tag = 'internal scratch']
  %s0 = inlined_call_operand.vmem [shape: f32[16,2], index: 0, kind: input, shape index: {}]
  %s1 = inlined_call_operand.vmem [shape: f32[2,128], index: 1, kind: input, shape index: {}]
  %s2 = inlined_call_operand.vmem [shape: f32[8,128], index: 2, kind: input, shape index: {}]
  %s3 = inlined_call_operand.hbm [shape: bf16[128,128], index: 3, kind: input, shape index: {}]
  %s4 = inlined_call_operand.vmem [shape: f32[8,128], index: 4, kind: input, shape index: {}]
  %s5 = inlined_call_operand.hbm [shape: f32[16,128], index: 5, kind: output, shape index: {}]
  %s6 = sld [smem:[#allocation0]]
  $region34: #{action_encoder_forward.1} parent=0
    _
  %s8 = ssub.s32 1, %s6
  %s9 = scalar_select 0, %s8, %s6
  $region1: #{action_encoder_forward.1} parent=0
    #allocation2 [shape = 'u8[32768]{0}', space=vmem, size = 0x8000, scoped, tag = 'input window, operand 3, single buffered']
    #allocation3 [shape = 's32[1]{0}', space=sflag, size = 0x4, scoped, tag = 'scoped memory for action_encoder_forward.1']
    #allocation4 [shape = 's32[1]{0}', space=sflag, size = 0x4, scoped, tag = 'scoped memory for action_encoder_forward.1']
    #allocation5 [shape = 'u8[8192]{0}', space=vmem, size = 0x2000, scoped, tag = 'output window, operand 0, single buffered']
    %10 = vsyncpa [#allocation3], 0
    %11 = vsyncpa [#allocation4], 0
    // Predicated region
    $region2: #{action_encoder_forward.1} parent=1 // pred_check
      _
    $region3: #{action_encoder_forward.1} parent=1 // pred_check_branch
      %13 = sbr.rel (0) target = $region5
    $region4: #{action_encoder_forward.1} parent=1 // pred_region
      _
    $region5: #{action_encoder_forward.1} parent=1 // pred_fallthru
      _
    // Predicated region
    $region6: #{action_encoder_forward.1} parent=1 // pred_check
      _
    $region7: #{action_encoder_forward.1} parent=1 // pred_check_branch
      %15 = sbr.rel (0) target = $region9
    $region8: #{action_encoder_forward.1} parent=1 // pred_region
      _
    $region9: #{action_encoder_forward.1} parent=1 // pred_fallthru
      _
    // Predicated region
    $region10: #{action_encoder_forward.1} parent=1 // pred_check
      _
    $region11: #{action_encoder_forward.1} parent=1 // pred_check_branch
      %17 = sbr.rel (0) target = $region13
    $region12: #{action_encoder_forward.1} parent=1 // pred_region
      _
    $region13: #{action_encoder_forward.1} parent=1 // pred_fallthru
      _
    // Predicated region
    $region14: #{action_encoder_forward.1} parent=1 // pred_check
      _
    $region15: #{action_encoder_forward.1} parent=1 // pred_check_branch
      %19 = sbr.rel (0) target = $region17
    $region16: #{action_encoder_forward.1} parent=1 // pred_region
      %s21 = ssub.s32 1024, 1024
      %22 = vsyncadd [#allocation3], %s21
      %s23 = sshll.u32 [#allocation2], 4
      %s24 = int_to_ptr.vmem [resolvable:$true] %s23
      %29 = dma.hbm_to_vmem [thread:$0]  %s3, 1024, %s24, [#allocation3], 64, 64, 4
    $region17: #{action_encoder_forward.1} parent=1 // pred_fallthru
      _
    // Predicated region
    $region18: #{action_encoder_forward.1} parent=1 // pred_check
      _
    $region19: #{action_encoder_forward.1} parent=1 // pred_check_branch
      %31 = sbr.rel (0) target = $region21
    $region20: #{action_encoder_forward.1} parent=1 // pred_region
      _
    $region21: #{action_encoder_forward.1} parent=1 // pred_fallthru
      _
    // Predicated region
    $region22: #{action_encoder_forward.1} parent=1 // pred_check
      _
    $region23: #{action_encoder_forward.1} parent=1 // pred_check_branch
      %33 = sbr.rel (0) target = $region25
    $region24: #{action_encoder_forward.1} parent=1 // pred_region
      %34 = dma.done [#allocation3], 1024
    $region25: #{action_encoder_forward.1} parent=1 // pred_fallthru
      _
    %v36 = vld [vmem:[%s0] sm:$0xff]
    %v37 = vld [vmem:[%s0 + $0x8] sm:$0xff]
    %v38 = vld [vmem:[%s1] sm:$0x1]
    %40 = vset.pattern.permute.xlu0 0
    %41 = vperm.xlu0 %40, %v36
    %v42 = vpop.permute.xlu0 %41
    %45 = vset.pattern.permute.xlu0 0
    %46 = vperm.xlu0 %45, %v37
    %v47 = vpop.permute.xlu0 %46
    %v49 = vlaneseq
    %v50 = vshrl.u32 %v49, 7
    %v51 = vsub.s32 0, %v50
    %v52 = vrot.slane %v38, %v51
    %v53 = vmul.f32 %v42, %v52
    %v54 = vmul.f32 %v47, %v52
    %v55 = vld [vmem:[%s1 + $0x1] sm:$0x1]
    %56 = vset.pattern.permute.xlu0 1
    %57 = vperm.xlu0 %56, %v36
    %v58 = vpop.permute.xlu0 %57
    %60 = vset.pattern.permute.xlu0 1
    %61 = vperm.xlu0 %60, %v37
    %v62 = vpop.permute.xlu0 %61
    %v64 = vlaneseq
    %v65 = vshrl.u32 %v64, 7
    %v66 = vsub.s32 0, %v65
    %v67 = vrot.slane %v55, %v66
    %v68 = vmul.f32 %v58, %v67
    %v69 = vmul.f32 %v62, %v67
    %v70 = vadd.f32 %v53, %v68
    %v71 = vadd.f32 %v54, %v69
    %v72 = vld [vmem:[%s2] sm:$0x1]
    %v73 = vlaneseq
    %v74 = vshrl.u32 %v73, 7
    %v75 = vsub.s32 0, %v74
    %v76 = vrot.slane %v72, %v75
    %v77 = vadd.f32 %v70, %v76
    %v78 = vadd.f32 %v71, %v76
    %v79 = vmul.f32 %v77, %v77
    %v80 = vmul.f32 %v78, %v78
    %81 = vadd.xlane.f32.xlu0 %v79
    %v82 = vpop.xlane.xlu0 %81
    %83 = vadd.xlane.f32.xlu0 %v80
    %v84 = vpop.xlane.xlu0 %83
    %v85 = vrcp.pop 128.0
    %v86 = vmul.f32 %v82, %v85
    %v87 = vmul.f32 %v84, %v85
    %v88 = vadd.f32 %v86, 1e-05
    %v89 = vadd.f32 %v87, 1e-05
    %v90 = vrsqrt.pop %v88
    %v91 = vrsqrt.pop %v89
    %v92 = vmul.f32 %v77, %v90
    %v93 = vmul.f32 %v78, %v91
    %v94 = vld [vmem:[%s2 + $0x1] sm:$0x1]
    %v95 = vlaneseq
    %v96 = vshrl.u32 %v95, 7
    %v97 = vsub.s32 0, %v96
    %v98 = vrot.slane %v94, %v97
    %v99 = vmul.f32 %v92, %v98
    %v100 = vmul.f32 %v93, %v98
    %v101 = vld [vmem:[%s2 + $0x2] sm:$0x1]
    %v102 = vlaneseq
    %v103 = vshrl.u32 %v102, 7
    %v104 = vsub.s32 0, %v103
    %v105 = vrot.slane %v101, %v104
    %v106 = vadd.f32 %v99, %v105
    %v107 = vadd.f32 %v100, %v105
    %v108 = vmul.f32 %v106, 0.2
    %v109 = vmul.f32 %v107, 0.2
    %v110 = vmax.f32 %v106, %v108
    %v111 = vmax.f32 %v107, %v109
    %v112 = vpack.c.bf16 %v111, %v110
    %v113 = vld [vmem:[#allocation2] sm:$0xf]
    %v114 = vld [vmem:[#allocation2 + $0x4] sm:$0xf]
    %v115 = vld [vmem:[#allocation2 + $0x8] sm:$0xf]
    %v116 = vld [vmem:[#allocation2 + $0xc] sm:$0xf]
    %v117 = vld [vmem:[#allocation2 + $0x10] sm:$0xf]
    %v118 = vld [vmem:[#allocation2 + $0x14] sm:$0xf]
    %v119 = vld [vmem:[#allocation2 + $0x18] sm:$0xf]
    %v120 = vld [vmem:[#allocation2 + $0x1c] sm:$0xf]
    %v121 = vld [vmem:[#allocation2 + $0x20] sm:$0xf]
    %v122 = vld [vmem:[#allocation2 + $0x24] sm:$0xf]
    %v123 = vld [vmem:[#allocation2 + $0x28] sm:$0xf]
    %v124 = vld [vmem:[#allocation2 + $0x2c] sm:$0xf]
    %v125 = vld [vmem:[#allocation2 + $0x30] sm:$0xf]
    %v126 = vld [vmem:[#allocation2 + $0x34] sm:$0xf]
    %v127 = vld [vmem:[#allocation2 + $0x38] sm:$0xf]
    %v128 = vld [vmem:[#allocation2 + $0x3c] sm:$0xf]
    %v129 = vld [vmem:[%s4] sm:$0x1]
    %v130 = vlaneseq
    %v131 = vshrl.u32 %v130, 7
    %v132 = vsub.s32 0, %v131
    %v133 = vrot.slane %v129, %v132
    %v150 = vunpack.c.l.b16 %v113
    %v151 = vunpack.c.l.b16 %v114
    %v152 = vunpack.c.l.b16 %v115
    %v153 = vunpack.c.l.b16 %v116
    %v154 = vunpack.c.l.b16 %v117
    %v155 = vunpack.c.l.b16 %v118
    %v156 = vunpack.c.l.b16 %v119
    %v157 = vunpack.c.l.b16 %v120
    %v158 = vunpack.c.l.b16 %v121
    %v159 = vunpack.c.l.b16 %v122
    %v160 = vunpack.c.l.b16 %v123
    %v161 = vunpack.c.l.b16 %v124
    %v162 = vunpack.c.l.b16 %v125
    %v163 = vunpack.c.l.b16 %v126
    %v164 = vunpack.c.l.b16 %v127
    %v165 = vunpack.c.l.b16 %v128
    %v166 = vpack.c.b16 %v151, %v150
    %v167 = vpack.c.b16 %v153, %v152
    %v168 = vpack.c.b16 %v155, %v154
    %v169 = vpack.c.b16 %v157, %v156
    %v170 = vpack.c.b16 %v159, %v158
    %v171 = vpack.c.b16 %v161, %v160
    %v172 = vpack.c.b16 %v163, %v162
    %v173 = vpack.c.b16 %v165, %v164
    %182 = vmatprep.subr.bf16.mxu0 0
    %183 = vmatpush1.bf16.msra.mxu0 %v173
    %184 = vmatprep.subr.bf16.mxu0 0
    %185 = vmatpush1.bf16.msra.mxu0 %v172
    %186 = vmatprep.subr.bf16.mxu0 0
    %187 = vmatpush1.bf16.msra.mxu0 %v171
    %188 = vmatprep.subr.bf16.mxu0 0
    %189 = vmatpush1.bf16.msra.mxu0 %v170
    %190 = vmatprep.subr.bf16.mxu0 0
    %191 = vmatpush1.bf16.msra.mxu0 %v169
    %192 = vmatprep.subr.bf16.mxu0 0
    %193 = vmatpush1.bf16.msra.mxu0 %v168
    %194 = vmatprep.subr.bf16.mxu0 0
    %195 = vmatpush1.bf16.msra.mxu0 %v167
    %196 = vmatprep.subr.bf16.mxu0 0
    %197 = vmatpush1.bf16.msra.mxu0 %v166
    %198 = vmatprep.subr.bf16.mxu0 0
    %199 = vmatpush2.bf16.msra.mxu0 0
    %200 = vmatprep.subr.bf16.mxu0 0
    %201 = vmatpush2.bf16.msra.mxu0 0
    %202 = vmatprep.subr.bf16.mxu0 0
    %203 = vmatpush2.bf16.msra.mxu0 0
    %204 = vmatprep.subr.bf16.mxu0 0
    %205 = vmatpush2.bf16.msra.mxu0 0
    %206 = vmatprep.subr.bf16.mxu0 0
    %207 = vmatpush2.bf16.msra.mxu0 0
    %208 = vmatprep.subr.bf16.mxu0 0
    %209 = vmatpush2.bf16.msra.mxu0 0
    %210 = vmatprep.subr.bf16.mxu0 0
    %211 = vmatpush2.bf16.msra.mxu0 0
    %212 = vmatprep.subr.bf16.mxu0 0
    %213 = vmatpush2.bf16.msra.mxu0 0
    %214 = vmatprep.mubr.bf16.mxu0 0
    %215 = vmatmul.mubr.bf16.gmra.mxu0 %v112
    %v216 = vpop.f32.mrf.mxu0
    %v217 = vadd.f32 %v133, %v216
    %v218 = vpop.f32.mrf.mxu0
    %v219 = vpop.f32.mrf.mxu0
    %v220 = vadd.f32 %v133, %v219
    %v221 = vpop.f32.mrf.mxu0
    %222 = vdwg.mxu0
    %v223 = vmul.f32 %v217, %v217
    %v224 = vmul.f32 %v220, %v220
    %225 = vadd.xlane.f32.xlu0 %v223
    %v226 = vpop.xlane.xlu0 %225
    %227 = vadd.xlane.f32.xlu0 %v224
    %v228 = vpop.xlane.xlu0 %227
    %v229 = vmul.f32 %v226, %v85
    %v230 = vmul.f32 %v228, %v85
    %v231 = vadd.f32 %v229, 1e-05
    %v232 = vadd.f32 %v230, 1e-05
    %v233 = vrsqrt.pop %v231
    %v234 = vrsqrt.pop %v232
    %v235 = vmul.f32 %v217, %v233
    %v236 = vmul.f32 %v220, %v234
    %v237 = vld [vmem:[%s4 + $0x1] sm:$0x1]
    %v238 = vlaneseq
    %v239 = vshrl.u32 %v238, 7
    %v240 = vsub.s32 0, %v239
    %v241 = vrot.slane %v237, %v240
    %v242 = vmul.f32 %v235, %v241
    %v243 = vmul.f32 %v236, %v241
    %v244 = vld [vmem:[%s4 + $0x2] sm:$0x1]
    %v245 = vlaneseq
    %v246 = vshrl.u32 %v245, 7
    %v247 = vsub.s32 0, %v246
    %v248 = vrot.slane %v244, %v247
    %v249 = vadd.f32 %v242, %v248
    %v250 = vadd.f32 %v243, %v248
    %251 = vst [vmem:[#allocation5] sm:$0xff] %v249
    %252 = vst [vmem:[#allocation5 + $0x8] sm:$0xff] %v250
    // Predicated region
    $region26: #{action_encoder_forward.1} parent=1 // pred_check
      _
    $region27: #{action_encoder_forward.1} parent=1 // pred_check_branch
      %254 = sbr.rel (0) target = $region29
    $region28: #{action_encoder_forward.1} parent=1 // pred_region
      %s256 = ssub.s32 256, 256
      %257 = vsyncadd [#allocation4], %s256
      %s258 = sshll.u32 [#allocation5], 4
      %s259 = int_to_ptr.vmem [resolvable:$true] %s258
      %264 = dma.vmem_to_hbm [thread:$0]  %s259, 256, %s5, [#allocation4], 128, 128, 8
    $region29: #{action_encoder_forward.1} parent=1 // pred_fallthru
      _
    // Predicated region
    $region30: #{action_encoder_forward.1} parent=1 // pred_check
      _
    $region31: #{action_encoder_forward.1} parent=1 // pred_check_branch
      %266 = sbr.rel (0) target = $region33
    $region32: #{action_encoder_forward.1} parent=1 // pred_region
      %267 = dma.done [#allocation4], 256
    $region33: #{action_encoder_forward.1} parent=1 // pred_fallthru
      _
    %268 = vsyncpa [#allocation3], 1
    %269 = vsyncpa [#allocation4], 1

</llo_original>
